<compile_context>
chip_gen: v5e
topology: v5e:2x2
jax: 0.10.0
libtpu: 0.0.40
codegen_flags: <defaults>
</compile_context>

<pallas_src>
import functools

import jax
import jax.numpy as jnp
from jax.experimental import pallas as pl
from jax.experimental.pallas import tpu as pltpu


def _se_kernel(x_ref, w1_ref, w2_ref, o_ref, *, inv_hw, use_mxu):
    # x_ref/o_ref: (Bt, C, HW)
    # use_mxu=True : w1_ref (C, hid),  w2_ref (hid, C)   -> MXU dots
    # use_mxu=False: w1_ref (hid, C),  w2_ref (C, hid)   -> VPU lane contractions
    x = x_ref[...]  # native dtype, no blanket upcast copy

    # squeeze: spatial mean. f32 lane-axis sum, then the 1/(H*W) factor applied
    # to the tiny pooled array (exact w.r.t. the reference, no weight rounding).
    # TODO(synk): verify in the bundle dump that the f32-accumulating sum does
    # not materialize a full f32 copy of the block when x is bf16; if it does,
    # reduce in lane-chunks with a small f32 accumulator via lax.fori_loop.
    pooled = jnp.sum(x, axis=-1, dtype=jnp.float32) * inv_hw          # (Bt, C)

    w1 = w1_ref[...].astype(jnp.float32)
    w2 = w2_ref[...].astype(jnp.float32)

    if use_mxu:
        h = jnp.dot(pooled, w1, preferred_element_type=jnp.float32)   # (Bt, hid)
        h = h * jax.nn.sigmoid(h)                                     # SiLU
        g = jnp.dot(h, w2, preferred_element_type=jnp.float32)        # (Bt, C)
    else:
        # Tiny C/hid: keep the MLP on the VPU (lane-axis reductions), keeping
        # MXU weight-push/drain latency off the per-step serial chain (v7x).
        h = jnp.sum(pooled[:, None, :] * w1[None, :, :], axis=-1)     # (Bt, hid)
        h = h * jax.nn.sigmoid(h)                                     # SiLU
        g = jnp.sum(h[:, None, :] * w2[None, :, :], axis=-1)          # (Bt, C)

    g = jax.nn.sigmoid(g)

    # excite: broadcast the (small) gate over the lane (HW) axis in x's dtype.
    o_ref[...] = x * g.astype(x.dtype)[:, :, None]


def _vmem_capacity_bytes():
    """Physical VMEM per TensorCore; conservative (v7x-class) fallback."""
    try:
        info = pltpu.get_tpu_info()
        cap = getattr(info, "vmem_capacity_bytes", None)
        if cap:
            return int(cap)
    except Exception:
        pass
    return 64 << 20


def _pick_batch_block(B, slab_bytes, per_block_budget, min_steps,
                      target_block_bytes=2 << 20):
    """Pick Bt (a divisor of B) such that the per-step x block fits
    `per_block_budget`, the grid has >= min_steps steps (pipeline fill and
    v7x dual-TC split), and the block reaches ~target_block_bytes when that is
    compatible with the step-count requirement."""
    divisors = [d for d in range(1, B + 1) if B % d == 0]
    fits = [d for d in divisors if d * slab_bytes <= per_block_budget]
    if not fits:
        # A single batch element already exceeds the budget.
        # TODO(synk): two-phase HW-tiled fallback (pool-accumulate, then apply)
        # for very large C*H*W slabs; for now rely on vmem_limit headroom.
        return 1
    feasible = [d for d in fits if B // d >= min_steps] or fits
    reaching = [d for d in feasible if d * slab_bytes >= target_block_bytes]
    return min(reaching) if reaching else max(feasible)


def squeeze_excitation(x, w1, w2):
    """x: (B, C, H, W); w1: (C, hid) = Linear(dim->hid).weight.T;
    w2: (hid, C) = Linear(hid->dim).weight.T.  Returns (B, C, H, W)."""
    B, C, H, W = x.shape
    HW = H * W
    hid = w1.shape[1]
    x_flat = x.reshape(B, C, HW)

    # Generation-aware budgets.
    cap = _vmem_capacity_bytes()
    if cap <= (64 << 20):            # v7x-class: 64 MiB physical VMEM per TC
        x_buf_budget = 20 << 20      # total for 2 in + 2 out double-buffered x blocks
        vmem_cap_limit = 48 << 20    # leave headroom for Mosaic scratch / semaphores
    else:                            # v5e / v6e: 128 MiB physical VMEM
        x_buf_budget = 56 << 20
        vmem_cap_limit = 100 << 20

    slab_bytes = C * HW * x.dtype.itemsize
    min_steps = min(4, B)            # >= 2x TensorCores on v7x; pipeline fill elsewhere
    bt = _pick_batch_block(B, slab_bytes, x_buf_budget // 4, min_steps)

    # Tiny C/hid -> VPU lane contractions (weights passed transposed); otherwise MXU.
    use_mxu = (C > 128) or (hid > 128)
    if use_mxu:
        w1_k, w2_k = w1, w2          # (C, hid), (hid, C)
    else:
        w1_k, w2_k = w1.T, w2.T      # (hid, C), (C, hid)

    blk_bytes = bt * slab_bytes
    w_bytes = w1.size * w1.dtype.itemsize + w2.size * w2.dtype.itemsize
    # 2 in + 2 out x buffers, double-buffered weights, + scratch headroom.
    vmem_limit = 4 * blk_bytes + 2 * w_bytes + (4 << 20)
    vmem_limit = int(min(max(vmem_limit, 16 << 20), vmem_cap_limit))

    kernel = functools.partial(_se_kernel, inv_hw=float(1.0 / HW), use_mxu=use_mxu)

    # TODO(synk): for production MaxViT shapes with HW % 128 != 0 (e.g. 7*7, 14*14),
    # audit the bundle dump for masked vst; if present, pad HW to a multiple of 128
    # on the host or switch to a (B, HW, C) layout with C on lanes when C >= 128.
    out_flat = pl.pallas_call(
        kernel,
        out_shape=jax.ShapeDtypeStruct((B, C, HW), x.dtype),
        grid=(B // bt,),
        in_specs=[
            pl.BlockSpec((bt, C, HW), lambda b: (b, 0, 0)),   # x: one batch block / step
            pl.BlockSpec(w1_k.shape, lambda b: (0, 0)),       # w1: VMEM-resident
            pl.BlockSpec(w2_k.shape, lambda b: (0, 0)),       # w2: VMEM-resident
        ],
        out_specs=pl.BlockSpec((bt, C, HW), lambda b: (b, 0, 0)),
        compiler_params=pltpu.CompilerParams(
            dimension_semantics=("parallel",),                # batch steps split across TCs (v7x)
            vmem_limit_bytes=vmem_limit,
        ),
    )(x_flat, w1_k, w2_k)

    return out_flat.reshape(B, C, H, W)


def _reference(x, w1, w2):
    pooled = jnp.mean(x, axis=(2, 3))
    h = pooled @ w1
    h = h * jax.nn.sigmoid(h)
    g = jax.nn.sigmoid(h @ w2)
    return x * g[:, :, None, None]


if __name__ == "__main__":
    # dim = 16, shrinkage_rate = 0.25 -> hidden_dim = 4
    B, C, H, W = 2, 16, 16, 16
    hidden = int(C * 0.25)

    key = jax.random.PRNGKey(0)
    kx, k1, k2 = jax.random.split(key, 3)
    x = jax.random.normal(kx, (B, C, H, W), dtype=jnp.float32)
    # PyTorch Linear weight is (out, in); we store the transposed (in, out) matrices.
    w1 = jax.random.normal(k1, (C, hidden), dtype=jnp.float32) * 0.1   # Linear(dim -> hidden).weight.T
    w2 = jax.random.normal(k2, (hidden, C), dtype=jnp.float32) * 0.1   # Linear(hidden -> dim).weight.T

    out = squeeze_excitation(x, w1, w2)
    out = jax.block_until_ready(out)

    ref = _reference(x, w1, w2)
    assert out.shape == (B, C, H, W)
    assert jnp.allclose(out, ref, atol=1e-5, rtol=1e-5), "mismatch vs reference"

    print("KERNEL_OK")
</pallas_src>

<mosaic_0001>
module attributes {stable_mosaic.version = 11 : i64} {
  func.func @_se_kernel(%arg0: i32, %arg1: memref<1x16x256xf32, #tpu.memory_space<vmem>>, %arg2: memref<4x16xf32, #tpu.memory_space<vmem>>, %arg3: memref<16x4xf32, #tpu.memory_space<vmem>>, %arg4: memref<1x16x256xf32, #tpu.memory_space<vmem>>) attributes {dimension_semantics = [#tpu.dimension_semantics<parallel>], iteration_bounds = array<i64: 2>, scalar_prefetch = 0 : i64, scratch_operands = 0 : i64, tpu.core_type = #tpu.core_type<tc>, window_params = [{transform_indices = @transform_0, window_bounds = array<i64: 1, 16, 256>}, {pipeline_mode = #tpu.pipeline_mode<synchronous>, transform_indices = @transform_1, window_bounds = array<i64: 4, 16>}, {pipeline_mode = #tpu.pipeline_mode<synchronous>, transform_indices = @transform_2, window_bounds = array<i64: 16, 4>}, {transform_indices = @transform_3, window_bounds = array<i64: 1, 16, 256>}]} {
    %c0 = arith.constant 0 : index
    %c0_0 = arith.constant 0 : index
    %c0_1 = arith.constant 0 : index
    %0 = vector.load %arg1[%c0, %c0_0, %c0_1] : memref<1x16x256xf32, #tpu.memory_space<vmem>>, vector<1x16x256xf32>
    %cst = arith.constant dense<0.000000e+00> : vector<1x16xf32>
    %1 = vector.multi_reduction <add>, %0, %cst [2] : vector<1x16x256xf32> to vector<1x16xf32>
    %cst_2 = arith.constant 3.906250e-03 : f32
    %2 = vector.broadcast %cst_2 : f32 to vector<1x16xf32>
    %3 = arith.mulf %1, %2 : vector<1x16xf32>
    %c0_3 = arith.constant 0 : index
    %c0_4 = arith.constant 0 : index
    %4 = vector.load %arg2[%c0_3, %c0_4] : memref<4x16xf32, #tpu.memory_space<vmem>>, vector<4x16xf32>
    %c0_5 = arith.constant 0 : index
    %c0_6 = arith.constant 0 : index
    %5 = vector.load %arg3[%c0_5, %c0_6] : memref<16x4xf32, #tpu.memory_space<vmem>>, vector<16x4xf32>
    %6 = vector.shape_cast %3 : vector<1x16xf32> to vector<1x1x16xf32>
    %7 = vector.shape_cast %4 : vector<4x16xf32> to vector<1x4x16xf32>
    %8 = vector.broadcast %6 : vector<1x1x16xf32> to vector<1x4x16xf32>
    %9 = arith.mulf %8, %7 : vector<1x4x16xf32>
    %cst_7 = arith.constant dense<0.000000e+00> : vector<1x4xf32>
    %10 = vector.multi_reduction <add>, %9, %cst_7 [2] : vector<1x4x16xf32> to vector<1x4xf32>
    %11 = arith.negf %10 : vector<1x4xf32>
    %12 = math.exp %11 : vector<1x4xf32>
    %cst_8 = arith.constant 1.000000e+00 : f32
    %13 = vector.broadcast %cst_8 : f32 to vector<1x4xf32>
    %14 = arith.addf %13, %12 : vector<1x4xf32>
    %15 = arith.divf %13, %14 : vector<1x4xf32>
    %16 = arith.mulf %10, %15 : vector<1x4xf32>
    %17 = vector.shape_cast %16 : vector<1x4xf32> to vector<1x1x4xf32>
    %18 = vector.shape_cast %5 : vector<16x4xf32> to vector<1x16x4xf32>
    %19 = vector.broadcast %17 : vector<1x1x4xf32> to vector<1x16x4xf32>
    %20 = arith.mulf %19, %18 : vector<1x16x4xf32>
    %cst_9 = arith.constant dense<0.000000e+00> : vector<1x16xf32>
    %21 = vector.multi_reduction <add>, %20, %cst_9 [2] : vector<1x16x4xf32> to vector<1x16xf32>
    %22 = arith.negf %21 : vector<1x16xf32>
    %23 = math.exp %22 : vector<1x16xf32>
    %cst_10 = arith.constant 1.000000e+00 : f32
    %24 = vector.broadcast %cst_10 : f32 to vector<1x16xf32>
    %25 = arith.addf %24, %23 : vector<1x16xf32>
    %26 = arith.divf %24, %25 : vector<1x16xf32>
    %27 = vector.shape_cast %26 : vector<1x16xf32> to vector<1x16x1xf32>
    %28 = vector.broadcast %27 : vector<1x16x1xf32> to vector<1x16x256xf32>
    %29 = arith.mulf %0, %28 : vector<1x16x256xf32>
    %c0_11 = arith.constant 0 : index
    %c0_12 = arith.constant 0 : index
    %c0_13 = arith.constant 0 : index
    %30 = vector.load %arg4[%c0_11, %c0_12, %c0_13] : memref<1x16x256xf32, #tpu.memory_space<vmem>>, vector<1x16x256xf32>
    tpu.vector_store %arg4[%c0_11, %c0_12, %c0_13], %29 {strides = array<i32>} : memref<1x16x256xf32, #tpu.memory_space<vmem>>, vector<1x16x256xf32>,
    return
  }
  func.func @transform_0(%arg0: i32) -> (i32, i32, i32) {
    %c0_i32 = arith.constant 0 : i32
    %c0_i32_0 = arith.constant 0 : i32
    %c0_i32_1 = arith.constant 0 : i32
    return %arg0, %c0_i32, %c0_i32_0 : i32, i32, i32
  }
  func.func @transform_1(%arg0: i32) -> (i32, i32) {
    %c0_i32 = arith.constant 0 : i32
    %c0_i32_0 = arith.constant 0 : i32
    %c0_i32_1 = arith.constant 0 : i32
    return %c0_i32, %c0_i32_0 : i32, i32
  }
  func.func @transform_2(%arg0: i32) -> (i32, i32) {
    %c0_i32 = arith.constant 0 : i32
    %c0_i32_0 = arith.constant 0 : i32
    %c0_i32_1 = arith.constant 0 : i32
    return %c0_i32, %c0_i32_0 : i32, i32
  }
  func.func @transform_3(%arg0: i32) -> (i32, i32, i32) {
    %c0_i32 = arith.constant 0 : i32
    %c0_i32_0 = arith.constant 0 : i32
    %c0_i32_1 = arith.constant 0 : i32
    return %arg0, %c0_i32, %c0_i32_0 : i32, i32, i32
  }
}

</mosaic_0001>

<llo_original>
// kernel: tpu_custom_call.1
$region0: #{tpu_custom_call.1}
  #allocation0 [shape = 'u32[]', space=smem, size = 0x4, offset = 0x4, fixed_abs, tag = 'smem constant byte address 0x4 - core index']
  #allocation1 [shape = 'u32[72,128]{1,0:T(1,128)}', space=vmem, size = 0x9000, scoped, tag = 'internal scratch']
  %s0 = inlined_call_operand.hbm [shape: f32[2,16,256], index: 0, kind: input, shape index: {}]
  %s1 = inlined_call_operand.vmem [shape: f32[4,16], index: 1, kind: input, shape index: {}]
  %s2 = inlined_call_operand.vmem [shape: f32[16,4], index: 2, kind: input, shape index: {}]
  %s3 = inlined_call_operand.hbm [shape: f32[2,16,256], index: 3, kind: output, shape index: {}]
  %s4 = sld [smem:[#allocation0]]
  $region49: #{tpu_custom_call.1} parent=0
    _
  %s6 = ssub.s32 1, %s4
  %s7 = scalar_select 0, %s6, %s4
  $region1: #{tpu_custom_call.1} parent=0
    #allocation2 [shape = 'u8[32768]{0}', space=vmem, size = 0x8000, scoped, tag = 'input window, operand 0']
    #allocation3 [shape = 's32[2]{0}', space=sflag, size = 0x8, scoped, tag = 'scoped memory for tpu_custom_call.1']
    #allocation4 [shape = 's32[2]{0}', space=sflag, size = 0x8, scoped, tag = 'scoped memory for tpu_custom_call.1']
    #allocation5 [shape = 'u8[32768]{0}', space=vmem, size = 0x8000, scoped, tag = 'output window, operand 0']
    %8 = vsyncpa [#allocation3], 0
    %s9 = scalar_lea.sflag [#allocation3], 1
    %10 = vsyncpa %s9, 0
    %11 = vsyncpa [#allocation4], 0
    %s12 = scalar_lea.sflag [#allocation4], 1
    %13 = vsyncpa %s12, 0
    loop: start=0, step=1, limit=4
    $region2: #{tpu_custom_call.1} parent=1 // loop_pre_header
      _
    $region3: #{tpu_custom_call.1} parent=1 // loop_header
      %s15 = sphi 0, %s19
      %p16 = scmp.ge.s32.totalorder %s15, 4
      %s25 = sphi 0, %s27
      %s28 = sphi 0, %s25
      %s29 = sphi 0, %s28
      %s45 = sphi 0, %s29
      %s49 = sphi 0, %s49
      %s51 = sphi 0, %s49
      %s52 = sphi 0, %s51
      %s66 = sphi 0, %s52
      %s70 = sphi 0, %s70
      %s72 = sphi 0, %s70
      %s73 = sphi 0, %s72
      %s87 = sphi 0, %s73
      %s93 = sphi 0, %s95
      %s96 = sphi 0, %s93
      %s97 = sphi 0, %s96
      %s113 = sphi 0, %s97
    $region4: #{tpu_custom_call.1} parent=1 // loop_header_branch
      %18 = sbr.rel (%p16) target = $region8
    $region5: #{tpu_custom_call.1} parent=1 // loop_body
      %s20 = ssub.s32 %s15, 1
      %s21 = ssub.s32 %s15, 2
      %s22 = sadd.s32 %s15, 1
      %s23 = ssub.s32 %s15, %s22
      %p24 = scmp.eq.s32.totalorder %s23, 0
      %s26 = sadd.s32 %s25, 1
      %s27 = scalar_select %p24, %s25, %s26
      %p30 = pneg %p24
      %p31 = scmp.eq.s32.totalorder %s15, 1
      %p32 = por %p30, %p31
      %p33 = scmp.ne.s32.totalorder %s25, %s28
      %p34 = scmp.eq.s32.totalorder %s15, 0
      %p35 = por %p33, %p34
      %p36 = scmp.ne.s32.totalorder %s25, %s28
      %p37 = scmp.eq.s32.totalorder %s20, 1
      %p38 = por %p36, %p37
      %p39 = scmp.ne.s32.totalorder %s28, %s29
      %p40 = scmp.eq.s32.totalorder %s20, 0
      %p41 = por %p39, %p40
      %p42 = scmp.ne.s32.totalorder %s28, %s29
      %p43 = scmp.eq.s32.totalorder %s21, 1
      %p44 = por %p42, %p43
      %p46 = scmp.ne.s32.totalorder %s29, %s45
      %p47 = scmp.eq.s32.totalorder %s21, 0
      %p48 = por %p46, %p47
      %s50 = sadd.s32 %s49, 1
      %p53 = scmp.eq.s32.totalorder %s15, 1
      %p54 = scmp.ne.s32.totalorder %s49, %s51
      %p55 = scmp.eq.s32.totalorder %s15, 0
      %p56 = por %p54, %p55
      %p57 = scmp.ne.s32.totalorder %s49, %s51
      %p58 = scmp.eq.s32.totalorder %s20, 1
      %p59 = por %p57, %p58
      %p60 = scmp.ne.s32.totalorder %s51, %s52
      %p61 = scmp.eq.s32.totalorder %s20, 0
      %p62 = por %p60, %p61
      %p63 = scmp.ne.s32.totalorder %s51, %s52
      %p64 = scmp.eq.s32.totalorder %s21, 1
      %p65 = por %p63, %p64
      %p67 = scmp.ne.s32.totalorder %s52, %s66
      %p68 = scmp.eq.s32.totalorder %s21, 0
      %p69 = por %p67, %p68
      %s71 = sadd.s32 %s70, 1
      %p74 = scmp.eq.s32.totalorder %s15, 1
      %p75 = scmp.ne.s32.totalorder %s70, %s72
      %p76 = scmp.eq.s32.totalorder %s15, 0
      %p77 = por %p75, %p76
      %p78 = scmp.ne.s32.totalorder %s70, %s72
      %p79 = scmp.eq.s32.totalorder %s20, 1
      %p80 = por %p78, %p79
      %p81 = scmp.ne.s32.totalorder %s72, %s73
      %p82 = scmp.eq.s32.totalorder %s20, 0
      %p83 = por %p81, %p82
      %p84 = scmp.ne.s32.totalorder %s72, %s73
      %p85 = scmp.eq.s32.totalorder %s21, 1
      %p86 = por %p84, %p85
      %p88 = scmp.ne.s32.totalorder %s73, %s87
      %p89 = scmp.eq.s32.totalorder %s21, 0
      %p90 = por %p88, %p89
      %s91 = ssub.s32 %s15, %s22
      %p92 = scmp.eq.s32.totalorder %s91, 0
      %s94 = sadd.s32 %s93, 1
      %s95 = scalar_select %p92, %s93, %s94
      %p98 = pneg %p92
      %p99 = scmp.eq.s32.totalorder %s15, 1
      %p100 = por %p98, %p99
      %p101 = scmp.ne.s32.totalorder %s93, %s96
      %p102 = scmp.eq.s32.totalorder %s15, 0
      %p103 = por %p101, %p102
      %p104 = scmp.ne.s32.totalorder %s93, %s96
      %p105 = scmp.eq.s32.totalorder %s20, 1
      %p106 = por %p104, %p105
      %p107 = scmp.ne.s32.totalorder %s96, %s97
      %p108 = scmp.eq.s32.totalorder %s20, 0
      %p109 = por %p107, %p108
      %p110 = scmp.ne.s32.totalorder %s96, %s97
      %p111 = scmp.eq.s32.totalorder %s21, 1
      %p112 = por %p110, %p111
      %p114 = scmp.ne.s32.totalorder %s97, %s113
      %p115 = scmp.eq.s32.totalorder %s21, 0
      %p116 = por %p114, %p115
      %p117 = scmp.le.s32.totalorder 1, %s15
      %p118 = scmp.lt.s32.totalorder %s15, 3
      %p119 = pnand %p117, %p118
      %p120 = pneg %p119
      // Predicated region
      $region9: #{tpu_custom_call.1} parent=5 // pred_check
        _
      $region10: #{tpu_custom_call.1} parent=5 // pred_check_branch
        %122 = sbr.rel (%p119) target = $region12
      $region11: #{tpu_custom_call.1} parent=5 // pred_region
        %s123 = ssub.s32 %s15, 1
        // Predicated region
        $region13: #{tpu_custom_call.1} parent=11 // pred_check
          %p124 = pneg %p62
        $region14: #{tpu_custom_call.1} parent=11 // pred_check_branch
          %126 = sbr.rel (%p124) target = $region16
        $region15: #{tpu_custom_call.1} parent=11 // pred_region
          _
        $region16: #{tpu_custom_call.1} parent=11 // pred_fallthru
          _
        // Predicated region
        $region17: #{tpu_custom_call.1} parent=11 // pred_check
          %p127 = pneg %p83
        $region18: #{tpu_custom_call.1} parent=11 // pred_check_branch
          %129 = sbr.rel (%p127) target = $region20
        $region19: #{tpu_custom_call.1} parent=11 // pred_region
          _
        $region20: #{tpu_custom_call.1} parent=11 // pred_fallthru
          _
      $region12: #{tpu_custom_call.1} parent=5 // pred_fallthru
        _
      %p130 = scmp.lt.s32.totalorder %s15, 2
      // Predicated region
      $region21: #{tpu_custom_call.1} parent=5 // pred_check
        %p131 = pneg %p130
      $region22: #{tpu_custom_call.1} parent=5 // pred_check_branch
        %133 = sbr.rel (%p131) target = $region24
      $region23: #{tpu_custom_call.1} parent=5 // pred_region
        // Predicated region
        $region25: #{tpu_custom_call.1} parent=23 // pred_check
          %p134 = pneg %p35
        $region26: #{tpu_custom_call.1} parent=23 // pred_check_branch
          %136 = sbr.rel (%p134) target = $region28
        $region27: #{tpu_custom_call.1} parent=23 // pred_region
          %s137 = sand.u32 %s25, 1
          %s138 = scalar_lea.sflag [#allocation3], %s137
          %s139 = sand.u32 %s25, 1
          %s140 = smul.addr %s139, 32
          %s141 = scalar_lea.vmem [#allocation2], %s140
          %143 = vsyncadd %s138, 0
          %s144 = smul.addr %s15, 4
          %s145 = smul.addr %s144, 8
          %s146 = scalar_lea.hbm %s0, %s145
          %s147 = sshll.u32 %s146, 4
          %s148 = int_to_ptr.hbm [resolvable:$true] %s147
          %s149 = sshll.u32 %s141, 4
          %s150 = int_to_ptr.vmem [resolvable:$true] %s149
          %155 = dma.hbm_to_vmem [thread:$0]  %s148, 512, %s150, %s138, 256, 256, 16
        $region28: #{tpu_custom_call.1} parent=23 // pred_fallthru
          _
      $region24: #{tpu_custom_call.1} parent=5 // pred_fallthru
        _
      %p156 = scmp.le.s32.totalorder 1, %s15
      %p157 = scmp.lt.s32.totalorder %s15, 3
      %p158 = pnand %p156, %p157
      %p159 = pneg %p158
      // Predicated region
      $region29: #{tpu_custom_call.1} parent=5 // pred_check
        _
      $region30: #{tpu_custom_call.1} parent=5 // pred_check_branch
        %161 = sbr.rel (%p158) target = $region32
      $region31: #{tpu_custom_call.1} parent=5 // pred_region
        %s162 = ssub.s32 %s15, 1
        %s163 = sand.u32 %s28, 1
        %s164 = scalar_lea.sflag [#allocation3], %s163
        %s165 = sand.u32 %s28, 1
        %s166 = smul.addr %s165, 32
        %s167 = scalar_lea.vmem [#allocation2], %s166
        // Predicated region
        $region33: #{tpu_custom_call.1} parent=31 // pred_check
          %p168 = pneg %p41
        $region34: #{tpu_custom_call.1} parent=31 // pred_check_branch
          %170 = sbr.rel (%p168) target = $region36
        $region35: #{tpu_custom_call.1} parent=31 // pred_region
          %172 = dma.done %s164, 512
        $region36: #{tpu_custom_call.1} parent=31 // pred_fallthru
          _
        %s173 = sand.u32 %s28, 1
        %s174 = scalar_lea.sflag [#allocation3], %s173
        %s175 = sand.u32 %s28, 1
        %s176 = smul.addr %s175, 32
        %s177 = scalar_lea.vmem [#allocation2], %s176
        %p178 = pneg %p41
        %p179 = pneg %p38
        %p180 = pneg %p62
        %p181 = pneg %p59
        %p182 = pneg %p83
        %p183 = pneg %p80
        %p184 = pneg %p109
        %p185 = pneg %p106
        %s186 = sand.u32 %s96, 1
        %s187 = scalar_lea.sflag [#allocation4], %s186
        %s188 = sand.u32 %s96, 1
        %s189 = smul.addr %s188, 32
        %s190 = scalar_lea.vmem [#allocation5], %s189
        %v191 = vld [vmem:[%s167] sm:$0xff]
        %v192 = vld [vmem:[%s167 + $0x8] sm:$0xff]
        %v193 = vld [vmem:[%s167 + $0x10] sm:$0xff]
        %v194 = vld [vmem:[%s167 + $0x18] sm:$0xff]
        %v195 = vadd.f32 %v191, %v192
        %196 = vadd.xlane.f32.xlu0 %v195
        %v197 = vpop.xlane.xlu0 %196
        %v198 = vadd.f32 %v193, %v194
        %199 = vadd.xlane.f32.xlu0 %v198
        %v200 = vpop.xlane.xlu0 %199
        %v201 = vmul.f32 %v197, 0.00390625
        %v202 = vmul.f32 %v200, 0.00390625
        %v203 = vld [vmem:[%s1] sm:$0xf]
        %v204 = vld [vmem:[%s2] sm:$0xff]
        %v205 = vld [vmem:[%s2 + $0x8] sm:$0xff]
        %v207 = vperm.slane %v203, 0
        %v208 = vlaneseq
        %v209 = vshrl.u32 %v208, 7
        %211 = vset.pattern.permute.xlu0 %v209
        %212 = vperm.xlu0 %211, %v207
        %v213 = vpop.permute.xlu0 %212
        %v214 = vlaneseq
        %v215 = vshrl.u32 %v214, 7
        %v216 = vadd.s32 %v215, 8
        %217 = vset.pattern.permute.xlu0 %v216
        %218 = vperm.xlu0 %217, %v207
        %v219 = vpop.permute.xlu0 %218
        %v220 = vperm.slane %v203, 1
        %v221 = vlaneseq
        %v222 = vshrl.u32 %v221, 7
        %224 = vset.pattern.permute.xlu0 %v222
        %225 = vperm.xlu0 %224, %v220
        %v226 = vpop.permute.xlu0 %225
        %v227 = vlaneseq
        %v228 = vshrl.u32 %v227, 7
        %v229 = vadd.s32 %v228, 8
        %230 = vset.pattern.permute.xlu0 %v229
        %231 = vperm.xlu0 %230, %v220
        %v232 = vpop.permute.xlu0 %231
        %v233 = vperm.slane %v203, 2
        %v234 = vlaneseq
        %v235 = vshrl.u32 %v234, 7
        %237 = vset.pattern.permute.xlu0 %v235
        %238 = vperm.xlu0 %237, %v233
        %v239 = vpop.permute.xlu0 %238
        %v240 = vlaneseq
        %v241 = vshrl.u32 %v240, 7
        %v242 = vadd.s32 %v241, 8
        %243 = vset.pattern.permute.xlu0 %v242
        %244 = vperm.xlu0 %243, %v233
        %v245 = vpop.permute.xlu0 %244
        %v246 = vperm.slane %v203, 3
        %v247 = vlaneseq
        %v248 = vshrl.u32 %v247, 7
        %250 = vset.pattern.permute.xlu0 %v248
        %251 = vperm.xlu0 %250, %v246
        %v252 = vpop.permute.xlu0 %251
        %v253 = vlaneseq
        %v254 = vshrl.u32 %v253, 7
        %v255 = vadd.s32 %v254, 8
        %256 = vset.pattern.permute.xlu0 %v255
        %257 = vperm.xlu0 %256, %v246
        %v258 = vpop.permute.xlu0 %257
        %v267 = vmul.f32 %v201, %v213
        %v268 = vmul.f32 %v202, %v219
        %v269 = vmul.f32 %v201, %v226
        %v270 = vmul.f32 %v202, %v232
        %v271 = vmul.f32 %v201, %v239
        %v272 = vmul.f32 %v202, %v245
        %v273 = vmul.f32 %v201, %v252
        %v274 = vmul.f32 %v202, %v258
        %283 = vset.pattern.permute.xlu0 0
        %284 = vperm.xlu0 %283, %v267
        %v285 = vpop.permute.xlu0 %284
        %286 = vset.pattern.permute.xlu0 0
        %287 = vperm.xlu0 %286, %v268
        %v288 = vpop.permute.xlu0 %287
        %289 = vset.pattern.permute.xlu0 0
        %290 = vperm.xlu0 %289, %v269
        %v291 = vpop.permute.xlu0 %290
        %292 = vset.pattern.permute.xlu0 0
        %293 = vperm.xlu0 %292, %v270
        %v294 = vpop.permute.xlu0 %293
        %295 = vset.pattern.permute.xlu0 0
        %296 = vperm.xlu0 %295, %v271
        %v297 = vpop.permute.xlu0 %296
        %298 = vset.pattern.permute.xlu0 0
        %299 = vperm.xlu0 %298, %v272
        %v300 = vpop.permute.xlu0 %299
        %301 = vset.pattern.permute.xlu0 0
        %302 = vperm.xlu0 %301, %v273
        %v303 = vpop.permute.xlu0 %302
        %304 = vset.pattern.permute.xlu0 0
        %305 = vperm.xlu0 %304, %v274
        %v306 = vpop.permute.xlu0 %305
        %v307 = vlaneseq
        %v308 = vand.u32 %v307, 127
        %v309 = vperm.slane %v285, %v308
        %v310 = vadd.s32 %v308, 4294967288
        %v311 = vperm.slane %v288, %v310
        %vm312 = vcmask 130112
        %v313 = vsel %vm312, %v311, %v309
        %v314 = vperm.slane %v291, %v308
        %v315 = vperm.slane %v294, %v310
        %v316 = vsel %vm312, %v315, %v314
        %v317 = vperm.slane %v297, %v308
        %v318 = vperm.slane %v300, %v310
        %v319 = vsel %vm312, %v318, %v317
        %v320 = vperm.slane %v303, %v308
        %v321 = vperm.slane %v306, %v310
        %v322 = vsel %vm312, %v321, %v320
        %vm323 = vcmask 1041409
        %v324 = vsel %vm323, %v316, %v313
        %vm325 = vcmask 1042434
        %v326 = vsel %vm325, %v319, %v324
        %vm327 = vcmask 1043459
        %v328 = vsel %vm327, %v322, %v326
        %vm330 = vcmask 125952
        %v331 = vsel %vm330, %v328, 0.0
        %332 = vadd.xlane.f32.xlu0 %v331
        %v333 = vpop.xlane.xlu0 %332
        %v334 = vxor.u32 %v333, 2147483648
        %v335 = vmul.f32 %v334, 1.442695
        %v336 = vpow.pop %v335
        %v337 = vadd.f32 %v336, 1.0
        %v338 = vrcp.pop %v337
        %v339 = vmul.f32 %v337, %v338
        %v340 = vsub.f32 1.0, %v339
        %v341 = vmul.f32 %v338, %v340
        %v342 = vadd.f32 %v338, %v341
        %vm343 = vweird.f32 %v337
        %vm344 = vweird.f32 %v338
        %vm345 = vmor %vm343, %vm344
        %v346 = vsel %vm345, %v338, %v342
        %v347 = vand.u32 2147483647, %v337
        %vm348 = vcmp.eq.f32.partialorder %v347, 8.507059e+37
        %v349 = vand.u32 %v337, 2147483648
        %v350 = vor.u32 1.1754944e-38, %v349
        %v351 = vsel %vm348, %v350, %v346
        %v352 = vmul.f32 1.0, %v351
        %v353 = vmul.f32 %v333, %v352
        %v356 = vperm.slane %v204, 0
        %v357 = vlaneseq
        %v358 = vshrl.u32 %v357, 7
        %360 = vset.pattern.permute.xlu0 %v358
        %361 = vperm.xlu0 %360, %v356
        %v362 = vpop.permute.xlu0 %361
        %v363 = vperm.slane %v204, 1
        %v364 = vlaneseq
        %v365 = vshrl.u32 %v364, 7
        %367 = vset.pattern.permute.xlu0 %v365
        %368 = vperm.xlu0 %367, %v363
        %v369 = vpop.permute.xlu0 %368
        %v370 = vperm.slane %v204, 2
        %v371 = vlaneseq
        %v372 = vshrl.u32 %v371, 7
        %374 = vset.pattern.permute.xlu0 %v372
        %375 = vperm.xlu0 %374, %v370
        %v376 = vpop.permute.xlu0 %375
        %v377 = vperm.slane %v204, 3
        %v378 = vlaneseq
        %v379 = vshrl.u32 %v378, 7
        %381 = vset.pattern.permute.xlu0 %v379
        %382 = vperm.xlu0 %381, %v377
        %v383 = vpop.permute.xlu0 %382
        %v384 = vperm.slane %v204, 4
        %v385 = vlaneseq
        %v386 = vshrl.u32 %v385, 7
        %388 = vset.pattern.permute.xlu0 %v386
        %389 = vperm.xlu0 %388, %v384
        %v390 = vpop.permute.xlu0 %389
        %v391 = vperm.slane %v204, 5
        %v392 = vlaneseq
        %v393 = vshrl.u32 %v392, 7
        %395 = vset.pattern.permute.xlu0 %v393
        %396 = vperm.xlu0 %395, %v391
        %v397 = vpop.permute.xlu0 %396
        %v398 = vperm.slane %v204, 6
        %v399 = vlaneseq
        %v400 = vshrl.u32 %v399, 7
        %402 = vset.pattern.permute.xlu0 %v400
        %403 = vperm.xlu0 %402, %v398
        %v404 = vpop.permute.xlu0 %403
        %v405 = vperm.slane %v204, 7
        %v406 = vlaneseq
        %v407 = vshrl.u32 %v406, 7
        %409 = vset.pattern.permute.xlu0 %v407
        %410 = vperm.xlu0 %409, %v405
        %v411 = vpop.permute.xlu0 %410
        %v412 = vperm.slane %v205, 0
        %v413 = vlaneseq
        %v414 = vshrl.u32 %v413, 7
        %416 = vset.pattern.permute.xlu0 %v414
        %417 = vperm.xlu0 %416, %v412
        %v418 = vpop.permute.xlu0 %417
        %v419 = vperm.slane %v205, 1
        %v420 = vlaneseq
        %v421 = vshrl.u32 %v420, 7
        %423 = vset.pattern.permute.xlu0 %v421
        %424 = vperm.xlu0 %423, %v419
        %v425 = vpop.permute.xlu0 %424
        %v426 = vperm.slane %v205, 2
        %v427 = vlaneseq
        %v428 = vshrl.u32 %v427, 7
        %430 = vset.pattern.permute.xlu0 %v428
        %431 = vperm.xlu0 %430, %v426
        %v432 = vpop.permute.xlu0 %431
        %v433 = vperm.slane %v205, 3
        %v434 = vlaneseq
        %v435 = vshrl.u32 %v434, 7
        %437 = vset.pattern.permute.xlu0 %v435
        %438 = vperm.xlu0 %437, %v433
        %v439 = vpop.permute.xlu0 %438
        %v440 = vperm.slane %v205, 4
        %v441 = vlaneseq
        %v442 = vshrl.u32 %v441, 7
        %444 = vset.pattern.permute.xlu0 %v442
        %445 = vperm.xlu0 %444, %v440
        %v446 = vpop.permute.xlu0 %445
        %v447 = vperm.slane %v205, 5
        %v448 = vlaneseq
        %v449 = vshrl.u32 %v448, 7
        %451 = vset.pattern.permute.xlu0 %v449
        %452 = vperm.xlu0 %451, %v447
        %v453 = vpop.permute.xlu0 %452
        %v454 = vperm.slane %v205, 6
        %v455 = vlaneseq
        %v456 = vshrl.u32 %v455, 7
        %458 = vset.pattern.permute.xlu0 %v456
        %459 = vperm.xlu0 %458, %v454
        %v460 = vpop.permute.xlu0 %459
        %v461 = vperm.slane %v205, 7
        %v462 = vlaneseq
        %v463 = vshrl.u32 %v462, 7
        %465 = vset.pattern.permute.xlu0 %v463
        %466 = vperm.xlu0 %465, %v461
        %v467 = vpop.permute.xlu0 %466
        %v484 = vmul.f32 %v353, %v362
        %v485 = vmul.f32 %v353, %v369
        %v486 = vmul.f32 %v353, %v376
        %v487 = vmul.f32 %v353, %v383
        %v488 = vmul.f32 %v353, %v390
        %v489 = vmul.f32 %v353, %v397
        %v490 = vmul.f32 %v353, %v404
        %v491 = vmul.f32 %v353, %v411
        %v492 = vmul.f32 %v353, %v418
        %v493 = vmul.f32 %v353, %v425
        %v494 = vmul.f32 %v353, %v432
        %v495 = vmul.f32 %v353, %v439
        %v496 = vmul.f32 %v353, %v446
        %v497 = vmul.f32 %v353, %v453
        %v498 = vmul.f32 %v353, %v460
        %v499 = vmul.f32 %v353, %v467
        %516 = vset.pattern.permute.xlu0 0
        %517 = vperm.xlu0 %516, %v484
        %v518 = vpop.permute.xlu0 %517
        %519 = vset.pattern.permute.xlu0 0
        %520 = vperm.xlu0 %519, %v485
        %v521 = vpop.permute.xlu0 %520
        %522 = vset.pattern.permute.xlu0 0
        %523 = vperm.xlu0 %522, %v486
        %v524 = vpop.permute.xlu0 %523
        %525 = vset.pattern.permute.xlu0 0
        %526 = vperm.xlu0 %525, %v487
        %v527 = vpop.permute.xlu0 %526
        %528 = vset.pattern.permute.xlu0 0
        %529 = vperm.xlu0 %528, %v488
        %v530 = vpop.permute.xlu0 %529
        %531 = vset.pattern.permute.xlu0 0
        %532 = vperm.xlu0 %531, %v489
        %v533 = vpop.permute.xlu0 %532
        %534 = vset.pattern.permute.xlu0 0
        %535 = vperm.xlu0 %534, %v490
        %v536 = vpop.permute.xlu0 %535
        %537 = vset.pattern.permute.xlu0 0
        %538 = vperm.xlu0 %537, %v491
        %v539 = vpop.permute.xlu0 %538
        %540 = vset.pattern.permute.xlu0 0
        %541 = vperm.xlu0 %540, %v492
        %v542 = vpop.permute.xlu0 %541
        %543 = vset.pattern.permute.xlu0 0
        %544 = vperm.xlu0 %543, %v493
        %v545 = vpop.permute.xlu0 %544
        %546 = vset.pattern.permute.xlu0 0
        %547 = vperm.xlu0 %546, %v494
        %v548 = vpop.permute.xlu0 %547
        %549 = vset.pattern.permute.xlu0 0
        %550 = vperm.xlu0 %549, %v495
        %v551 = vpop.permute.xlu0 %550
        %552 = vset.pattern.permute.xlu0 0
        %553 = vperm.xlu0 %552, %v496
        %v554 = vpop.permute.xlu0 %553
        %555 = vset.pattern.permute.xlu0 0
        %556 = vperm.xlu0 %555, %v497
        %v557 = vpop.permute.xlu0 %556
        %558 = vset.pattern.permute.xlu0 0
        %559 = vperm.xlu0 %558, %v498
        %v560 = vpop.permute.xlu0 %559
        %561 = vset.pattern.permute.xlu0 0
        %562 = vperm.xlu0 %561, %v499
        %v563 = vpop.permute.xlu0 %562
        %v564 = vperm.slane %v518, %v308
        %v565 = vperm.slane %v521, %v308
        %v566 = vperm.slane %v524, %v308
        %v567 = vperm.slane %v527, %v308
        %v568 = vperm.slane %v530, %v308
        %v569 = vperm.slane %v533, %v308
        %v570 = vperm.slane %v536, %v308
        %v571 = vperm.slane %v539, %v308
        %v572 = vperm.slane %v542, %v308
        %v573 = vperm.slane %v545, %v308
        %v574 = vperm.slane %v548, %v308
        %v575 = vperm.slane %v551, %v308
        %v576 = vperm.slane %v554, %v308
        %v577 = vperm.slane %v557, %v308
        %v578 = vperm.slane %v560, %v308
        %v579 = vperm.slane %v563, %v308
        %v580 = vsel %vm323, %v565, %v564
        %v581 = vsel %vm325, %v566, %v580
        %v582 = vsel %vm327, %v567, %v581
        %vm583 = vcmask 1044484
        %v584 = vsel %vm583, %v568, %v582
        %vm585 = vcmask 1045509
        %v586 = vsel %vm585, %v569, %v584
        %vm587 = vcmask 1046534
        %v588 = vsel %vm587, %v570, %v586
        %vm589 = vcmask 1047559
        %v590 = vsel %vm589, %v571, %v588
        %v591 = vsel %vm323, %v573, %v572
        %v592 = vsel %vm325, %v574, %v591
        %v593 = vsel %vm327, %v575, %v592
        %v594 = vsel %vm583, %v576, %v593
        %v595 = vsel %vm585, %v577, %v594
        %v596 = vsel %vm587, %v578, %v595
        %v597 = vsel %vm589, %v579, %v596
        %vm600 = vcmask 31744
        %v601 = vsel %vm600, %v590, 0.0
        %602 = vadd.xlane.f32.xlu0 %v601
        %v603 = vpop.xlane.xlu0 %602
        %v604 = vsel %vm600, %v597, 0.0
        %605 = vadd.xlane.f32.xlu0 %v604
        %v606 = vpop.xlane.xlu0 %605
        %v607 = vxor.u32 %v603, 2147483648
        %v608 = vxor.u32 %v606, 2147483648
        %v609 = vmul.f32 %v607, 1.442695
        %v610 = vpow.pop %v609
        %v611 = vmul.f32 %v608, 1.442695
        %v612 = vpow.pop %v611
        %v613 = vadd.f32 %v610, 1.0
        %v614 = vadd.f32 %v612, 1.0
        %v615 = vrcp.pop %v613
        %v616 = vmul.f32 %v613, %v615
        %v617 = vsub.f32 1.0, %v616
        %v618 = vmul.f32 %v615, %v617
        %v619 = vadd.f32 %v615, %v618
        %vm620 = vweird.f32 %v613
        %vm621 = vweird.f32 %v615
        %vm622 = vmor %vm620, %vm621
        %v623 = vsel %vm622, %v615, %v619
        %v624 = vand.u32 2147483647, %v613
        %vm625 = vcmp.eq.f32.partialorder %v624, 8.507059e+37
        %v626 = vand.u32 %v613, 2147483648
        %v627 = vor.u32 1.1754944e-38, %v626
        %v628 = vsel %vm625, %v627, %v623
        %v629 = vmul.f32 1.0, %v628
        %v630 = vrcp.pop %v614
        %v631 = vmul.f32 %v614, %v630
        %v632 = vsub.f32 1.0, %v631
        %v633 = vmul.f32 %v630, %v632
        %v634 = vadd.f32 %v630, %v633
        %vm635 = vweird.f32 %v614
        %vm636 = vweird.f32 %v630
        %vm637 = vmor %vm635, %vm636
        %v638 = vsel %vm637, %v630, %v634
        %v639 = vand.u32 2147483647, %v614
        %vm640 = vcmp.eq.f32.partialorder %v639, 8.507059e+37
        %v641 = vand.u32 %v614, 2147483648
        %v642 = vor.u32 1.1754944e-38, %v641
        %v643 = vsel %vm640, %v642, %v638
        %v644 = vmul.f32 1.0, %v643
        %v645 = vmul.f32 %v191, %v629
        %v646 = vmul.f32 %v192, %v629
        %v647 = vmul.f32 %v193, %v644
        %v648 = vmul.f32 %v194, %v644
        %649 = vst [vmem:[%s190] sm:$0xff] %v645
        %650 = vst [vmem:[%s190 + $0x8] sm:$0xff] %v646
        %651 = vst [vmem:[%s190 + $0x10] sm:$0xff] %v647
        %652 = vst [vmem:[%s190 + $0x18] sm:$0xff] %v648
        %s653 = sand.u32 %s96, 1
        %s654 = scalar_lea.sflag [#allocation4], %s653
        %s655 = sand.u32 %s96, 1
        %s656 = smul.addr %s655, 32
        %s657 = scalar_lea.vmem [#allocation5], %s656
        // Predicated region
        $region37: #{tpu_custom_call.1} parent=31 // pred_check
          %p658 = pneg %p106
        $region38: #{tpu_custom_call.1} parent=31 // pred_check_branch
          %660 = sbr.rel (%p658) target = $region40
        $region39: #{tpu_custom_call.1} parent=31 // pred_region
          %662 = vsyncadd %s654, 0
          %s663 = smul.addr %s20, 4
          %s664 = smul.addr %s663, 8
          %s665 = scalar_lea.hbm %s3, %s664
          %s666 = sshll.u32 %s657, 4
          %s667 = int_to_ptr.vmem [resolvable:$true] %s666
          %s668 = sshll.u32 %s665, 4
          %s669 = int_to_ptr.hbm [resolvable:$true] %s668
          %674 = dma.vmem_to_hbm [thread:$0]  %s667, 512, %s669, %s654, 256, 256, 16
        $region40: #{tpu_custom_call.1} parent=31 // pred_fallthru
          _
      $region32: #{tpu_custom_call.1} parent=5 // pred_fallthru
        _
      %p675 = scmp.le.s32.totalorder 2, %s15
      // Predicated region
      $region41: #{tpu_custom_call.1} parent=5 // pred_check
        %p676 = pneg %p675
      $region42: #{tpu_custom_call.1} parent=5 // pred_check_branch
        %678 = sbr.rel (%p676) target = $region44
      $region43: #{tpu_custom_call.1} parent=5 // pred_region
        %s679 = ssub.s32 %s15, 2
        // Predicated region
        $region45: #{tpu_custom_call.1} parent=43 // pred_check
          %p680 = pneg %p112
        $region46: #{tpu_custom_call.1} parent=43 // pred_check_branch
          %682 = sbr.rel (%p680) target = $region48
        $region47: #{tpu_custom_call.1} parent=43 // pred_region
          %s683 = sand.u32 %s97, 1
          %s684 = scalar_lea.sflag [#allocation4], %s683
          %s685 = sand.u32 %s97, 1
          %s686 = smul.addr %s685, 32
          %s687 = scalar_lea.vmem [#allocation5], %s686
          %689 = dma.done %s684, 512
        $region48: #{tpu_custom_call.1} parent=43 // pred_fallthru
          _
      $region44: #{tpu_custom_call.1} parent=5 // pred_fallthru
        _
    $region6: #{tpu_custom_call.1} parent=1 // loop_footer
      %s19 = sadd.s32 1, %s15
    $region7: #{tpu_custom_call.1} parent=1 // loop_footer_branch
      %14 = sbr.rel target = $region3
    $region8: #{tpu_custom_call.1} parent=1 // loop_exit
      _
    %690 = vsyncpa [#allocation3], 1
    %s691 = scalar_lea.sflag [#allocation3], 1
    %692 = vsyncpa %s691, 1
    %693 = vsyncpa [#allocation4], 1
    %s694 = scalar_lea.sflag [#allocation4], 1
    %695 = vsyncpa %s694, 1

</llo_original>
